<compile_context>
chip_gen: v5e
topology: v5e:2x2
jax: 0.10.0
libtpu: 0.0.40
codegen_flags: <defaults>
</compile_context>

<pallas_src>
import math

import jax
import jax.numpy as jnp
from jax.experimental import pallas as pl
from jax.experimental.pallas import tpu as pltpu


def _adapter_kernel(w1_ref, b1_ref, w2_ref, b2_ref, x_ref, o_ref):
    """One (C, TS) spatial tile of one image.

    w1_ref : SMEM (hidden, C)      conv1 weight
    b1_ref : SMEM (hidden,)        conv1 bias
    w2_ref : SMEM (C_out, hidden)  conv2 weight, Scaler folded in
    b2_ref : SMEM (C_out,)         conv2 bias,  Scaler folded in
    x_ref  : VMEM (C, TS)          channels on sublanes, spatial on lanes
    o_ref  : VMEM (C_out, TS)
    """
    C, TS = x_ref.shape
    hidden = w1_ref.shape[0]
    c_out = w2_ref.shape[0]
    inv_sqrt2 = 1.0 / math.sqrt(2.0)

    x = x_ref[...].astype(jnp.float32)                    # (C, TS)
    x_rows = [x[c:c + 1, :] for c in range(C)]            # each (1, TS)

    # Conv2d(C, hidden, 1) + exact (erf) GELU.  Contraction is only C terms,
    # so unroll it as scalar*vector VPU FMAs rather than using the MXU.
    g_rows = []
    for j in range(hidden):
        acc = jnp.full((1, TS), b1_ref[j], dtype=jnp.float32)
        for c in range(C):
            acc = acc + w1_ref[j, c] * x_rows[c]
        g_rows.append(0.5 * acc * (1.0 + jax.lax.erf(acc * inv_sqrt2)))

    # Conv2d(hidden, C_out, 1) (Scaler pre-folded) + residual, row by row.
    for o in range(c_out):
        y = jnp.full((1, TS), b2_ref[o], dtype=jnp.float32)
        for j in range(hidden):
            y = y + w2_ref[o, j] * g_rows[j]
        o_ref[o:o + 1, :] = (y + x_rows[o]).astype(o_ref.dtype)


def _pick_spatial_tile(s, cap=8192):
    """Largest lane-dense spatial tile: divisor of s that is a multiple of 128
    (capped), else the full spatial extent."""
    if s <= cap:
        return s
    if s % 128 == 0:
        best = 128
        for t in range(128, cap + 1, 128):
            if s % t == 0:
                best = t
        return best
    # TODO(synk): pad ragged spatial extents instead of taking one huge block.
    return s


def conv2d_adapter_before(x_nchw, w1, b1, w2, b2, scale, *, spatial_tile_cap=8192):
    """Computes `layer(x) + x` for Conv2dAdapter with mode='before'.

    x_nchw : (N, C_in, H, W)
    w1     : (hidden, C_in, 1, 1)   conv1 weight (PyTorch layout)
    b1     : (hidden,)
    w2     : (C_out, hidden, 1, 1)  conv2 weight (PyTorch layout)
    b2     : (C_out,)
    scale  : scalar (Scaler)
    """
    N, C, H, W = x_nchw.shape
    hidden = w1.shape[0]
    c_out = w2.shape[0]
    assert c_out == C, "residual add requires out_channels == in_channels"

    S = H * W
    TS = _pick_spatial_tile(S, spatial_tile_cap)
    assert S % TS == 0

    # Pure reshape: channels stay on sublanes, spatial goes on lanes.
    x3 = x_nchw.reshape(N, C, S)

    # Tiny weights -> SMEM via scalar prefetch; fold the Scaler into conv2.
    scale_f = jnp.asarray(scale, jnp.float32)
    w1_r = w1.reshape(hidden, C).astype(jnp.float32)
    b1_r = b1.astype(jnp.float32)
    w2_r = (w2.reshape(c_out, hidden) * scale_f).astype(jnp.float32)
    b2_r = (b2.astype(jnp.float32) * scale_f)

    idx = lambda n, s, w1_, b1_, w2_, b2_: (n, 0, s)

    block_bytes = (C + c_out) * TS * x_nchw.dtype.itemsize
    vmem_limit = int(min(32 << 20, max(4 << 20, 8 * block_bytes)))

    out3 = pl.pallas_call(
        _adapter_kernel,
        out_shape=jax.ShapeDtypeStruct((N, c_out, S), x_nchw.dtype),
        grid_spec=pltpu.PrefetchScalarGridSpec(
            num_scalar_prefetch=4,
            grid=(N, S // TS),
            in_specs=[pl.BlockSpec((None, C, TS), idx)],
            out_specs=pl.BlockSpec((None, c_out, TS), idx),
        ),
        compiler_params=pltpu.CompilerParams(
            dimension_semantics=("parallel", "parallel"),
            vmem_limit_bytes=vmem_limit),
    )(w1_r, b1_r, w2_r, b2_r, x3)

    return out3.reshape(N, c_out, H, W)


def conv2d_adapter_forward(module_fn, x_nchw, params):
    """Conv2dAdapter.forward with mode='before':  module(layer(x) + x)."""
    y = conv2d_adapter_before(x_nchw, *params)
    return module_fn(y)


def _reference(x_nchw, w1, b1, w2, b2, scale):
    N, C, H, W = x_nchw.shape
    hidden = w1.shape[0]
    c_out = w2.shape[0]
    xs = x_nchw.reshape(N, C, H * W).astype(jnp.float32)
    h = jnp.einsum('hc,ncs->nhs', w1.reshape(hidden, C), xs) + b1[None, :, None]
    h = 0.5 * h * (1.0 + jax.lax.erf(h / math.sqrt(2.0)))
    y = jnp.einsum('oh,nhs->nos', w2.reshape(c_out, hidden), h) + b2[None, :, None]
    y = y * scale + xs
    return y.reshape(N, c_out, H, W).astype(x_nchw.dtype)


if __name__ == "__main__":
    # Module config: in_channels=4, down_sample=5 (int) -> hidden_dim=5,
    # out_channels=None -> 4, mode='before', scale learnable.
    N, C, Hdim, Wdim = 2, 4, 16, 16
    hidden = 5

    key = jax.random.PRNGKey(0)
    kx, k1, kb1, k2, kb2 = jax.random.split(key, 5)

    x = jax.random.normal(kx, (N, C, Hdim, Wdim), dtype=jnp.float32)

    # NOTE: reset_parameters() in the PyTorch module zeros conv2 weight/bias
    # (adapter starts as identity); use small nonzero values here so the
    # kernel compute path is actually exercised.
    bound = 1.0 / math.sqrt(C)
    w1 = jax.random.uniform(k1, (hidden, C, 1, 1), jnp.float32, -bound, bound)
    b1 = jax.random.uniform(kb1, (hidden,), jnp.float32, -bound, bound)
    w2 = jax.random.uniform(k2, (C, hidden, 1, 1), jnp.float32, -0.1, 0.1)
    b2 = jax.random.uniform(kb2, (C,), jnp.float32, -0.1, 0.1)
    scale = 0.5  # Scaler value (init 1.0 in PyTorch; 0.5 exercises the folding)

    params = (w1, b1, w2, b2, scale)

    # External wrapped `module` is unknown at adapter-definition time.
    # TODO(synk): plug the real wrapped module in as module_fn.
    module_fn = lambda t: t

    out = conv2d_adapter_forward(module_fn, x, params)
    out = jax.block_until_ready(out)

    ref = _reference(x, w1, b1, w2, b2, scale)
    assert out.shape == (N, C, Hdim, Wdim)
    assert jnp.allclose(out, ref, atol=1e-5, rtol=1e-5), "mismatch vs reference"

    print("KERNEL_OK")
</pallas_src>

<mosaic_0001>
module attributes {stable_mosaic.version = 11 : i64} {
  func.func @_adapter_kernel(%arg0: i32, %arg1: i32, %arg2: memref<5x4xf32, #tpu.memory_space<smem>>, %arg3: memref<5xf32, #tpu.memory_space<smem>>, %arg4: memref<4x5xf32, #tpu.memory_space<smem>>, %arg5: memref<4xf32, #tpu.memory_space<smem>>, %arg6: memref<1x4x256xf32, #tpu.memory_space<vmem>>, %arg7: memref<1x4x256xf32, #tpu.memory_space<vmem>>) attributes {dimension_semantics = [#tpu.dimension_semantics<parallel>, #tpu.dimension_semantics<parallel>], iteration_bounds = array<i64: 2, 1>, scalar_prefetch = 4 : i64, scratch_operands = 0 : i64, tpu.core_type = #tpu.core_type<tc>, window_params = [{transform_indices = @transform_0, window_bounds = array<i64: 1, 4, 256>}, {transform_indices = @transform_1, window_bounds = array<i64: 1, 4, 256>}]} {
    %c0 = arith.constant 0 : index
    %c0_0 = arith.constant 0 : index
    %c0_1 = arith.constant 0 : index
    %0 = vector.load %arg6[%c0, %c0_0, %c0_1] : memref<1x4x256xf32, #tpu.memory_space<vmem>>, vector<1x4x256xf32>
    %1 = vector.shape_cast %0 : vector<1x4x256xf32> to vector<4x256xf32>
    %2 = vector.extract_strided_slice %1 {offsets = [0, 0], sizes = [1, 256], strides = [1, 1]} : vector<4x256xf32> to vector<1x256xf32>
    %3 = vector.extract_strided_slice %1 {offsets = [1, 0], sizes = [1, 256], strides = [1, 1]} : vector<4x256xf32> to vector<1x256xf32>
    %4 = vector.extract_strided_slice %1 {offsets = [2, 0], sizes = [1, 256], strides = [1, 1]} : vector<4x256xf32> to vector<1x256xf32>
    %5 = vector.extract_strided_slice %1 {offsets = [3, 0], sizes = [1, 256], strides = [1, 1]} : vector<4x256xf32> to vector<1x256xf32>
    %c0_2 = arith.constant 0 : index
    %6 = memref.load %arg3[%c0_2] : memref<5xf32, #tpu.memory_space<smem>>
    %7 = vector.broadcast %6 : f32 to vector<1x256xf32>
    %c0_3 = arith.constant 0 : index
    %c0_4 = arith.constant 0 : index
    %8 = memref.load %arg2[%c0_3, %c0_4] : memref<5x4xf32, #tpu.memory_space<smem>>
    %9 = vector.broadcast %8 : f32 to vector<1x256xf32>
    %10 = arith.mulf %9, %2 : vector<1x256xf32>
    %11 = arith.addf %7, %10 : vector<1x256xf32>
    %c0_5 = arith.constant 0 : index
    %c1 = arith.constant 1 : index
    %12 = memref.load %arg2[%c0_5, %c1] : memref<5x4xf32, #tpu.memory_space<smem>>
    %13 = vector.broadcast %12 : f32 to vector<1x256xf32>
    %14 = arith.mulf %13, %3 : vector<1x256xf32>
    %15 = arith.addf %11, %14 : vector<1x256xf32>
    %c0_6 = arith.constant 0 : index
    %c2 = arith.constant 2 : index
    %16 = memref.load %arg2[%c0_6, %c2] : memref<5x4xf32, #tpu.memory_space<smem>>
    %17 = vector.broadcast %16 : f32 to vector<1x256xf32>
    %18 = arith.mulf %17, %4 : vector<1x256xf32>
    %19 = arith.addf %15, %18 : vector<1x256xf32>
    %c0_7 = arith.constant 0 : index
    %c3 = arith.constant 3 : index
    %20 = memref.load %arg2[%c0_7, %c3] : memref<5x4xf32, #tpu.memory_space<smem>>
    %21 = vector.broadcast %20 : f32 to vector<1x256xf32>
    %22 = arith.mulf %21, %5 : vector<1x256xf32>
    %23 = arith.addf %19, %22 : vector<1x256xf32>
    %cst = arith.constant 5.000000e-01 : f32
    %24 = vector.broadcast %cst : f32 to vector<1x256xf32>
    %25 = arith.mulf %24, %23 : vector<1x256xf32>
    %cst_8 = arith.constant 0.707106769 : f32
    %26 = vector.broadcast %cst_8 : f32 to vector<1x256xf32>
    %27 = arith.mulf %23, %26 : vector<1x256xf32>
    %28 = math.erf %27 : vector<1x256xf32>
    %cst_9 = arith.constant 1.000000e+00 : f32
    %29 = vector.broadcast %cst_9 : f32 to vector<1x256xf32>
    %30 = arith.addf %29, %28 : vector<1x256xf32>
    %31 = arith.mulf %25, %30 : vector<1x256xf32>
    %c1_10 = arith.constant 1 : index
    %32 = memref.load %arg3[%c1_10] : memref<5xf32, #tpu.memory_space<smem>>
    %33 = vector.broadcast %32 : f32 to vector<1x256xf32>
    %c1_11 = arith.constant 1 : index
    %c0_12 = arith.constant 0 : index
    %34 = memref.load %arg2[%c1_11, %c0_12] : memref<5x4xf32, #tpu.memory_space<smem>>
    %35 = vector.broadcast %34 : f32 to vector<1x256xf32>
    %36 = arith.mulf %35, %2 : vector<1x256xf32>
    %37 = arith.addf %33, %36 : vector<1x256xf32>
    %c1_13 = arith.constant 1 : index
    %c1_14 = arith.constant 1 : index
    %38 = memref.load %arg2[%c1_13, %c1_14] : memref<5x4xf32, #tpu.memory_space<smem>>
    %39 = vector.broadcast %38 : f32 to vector<1x256xf32>
    %40 = arith.mulf %39, %3 : vector<1x256xf32>
    %41 = arith.addf %37, %40 : vector<1x256xf32>
    %c1_15 = arith.constant 1 : index
    %c2_16 = arith.constant 2 : index
    %42 = memref.load %arg2[%c1_15, %c2_16] : memref<5x4xf32, #tpu.memory_space<smem>>
    %43 = vector.broadcast %42 : f32 to vector<1x256xf32>
    %44 = arith.mulf %43, %4 : vector<1x256xf32>
    %45 = arith.addf %41, %44 : vector<1x256xf32>
    %c1_17 = arith.constant 1 : index
    %c3_18 = arith.constant 3 : index
    %46 = memref.load %arg2[%c1_17, %c3_18] : memref<5x4xf32, #tpu.memory_space<smem>>
    %47 = vector.broadcast %46 : f32 to vector<1x256xf32>
    %48 = arith.mulf %47, %5 : vector<1x256xf32>
    %49 = arith.addf %45, %48 : vector<1x256xf32>
    %cst_19 = arith.constant 5.000000e-01 : f32
    %50 = vector.broadcast %cst_19 : f32 to vector<1x256xf32>
    %51 = arith.mulf %50, %49 : vector<1x256xf32>
    %cst_20 = arith.constant 0.707106769 : f32
    %52 = vector.broadcast %cst_20 : f32 to vector<1x256xf32>
    %53 = arith.mulf %49, %52 : vector<1x256xf32>
    %54 = math.erf %53 : vector<1x256xf32>
    %cst_21 = arith.constant 1.000000e+00 : f32
    %55 = vector.broadcast %cst_21 : f32 to vector<1x256xf32>
    %56 = arith.addf %55, %54 : vector<1x256xf32>
    %57 = arith.mulf %51, %56 : vector<1x256xf32>
    %c2_22 = arith.constant 2 : index
    %58 = memref.load %arg3[%c2_22] : memref<5xf32, #tpu.memory_space<smem>>
    %59 = vector.broadcast %58 : f32 to vector<1x256xf32>
    %c2_23 = arith.constant 2 : index
    %c0_24 = arith.constant 0 : index
    %60 = memref.load %arg2[%c2_23, %c0_24] : memref<5x4xf32, #tpu.memory_space<smem>>
    %61 = vector.broadcast %60 : f32 to vector<1x256xf32>
    %62 = arith.mulf %61, %2 : vector<1x256xf32>
    %63 = arith.addf %59, %62 : vector<1x256xf32>
    %c2_25 = arith.constant 2 : index
    %c1_26 = arith.constant 1 : index
    %64 = memref.load %arg2[%c2_25, %c1_26] : memref<5x4xf32, #tpu.memory_space<smem>>
    %65 = vector.broadcast %64 : f32 to vector<1x256xf32>
    %66 = arith.mulf %65, %3 : vector<1x256xf32>
    %67 = arith.addf %63, %66 : vector<1x256xf32>
    %c2_27 = arith.constant 2 : index
    %c2_28 = arith.constant 2 : index
    %68 = memref.load %arg2[%c2_27, %c2_28] : memref<5x4xf32, #tpu.memory_space<smem>>
    %69 = vector.broadcast %68 : f32 to vector<1x256xf32>
    %70 = arith.mulf %69, %4 : vector<1x256xf32>
    %71 = arith.addf %67, %70 : vector<1x256xf32>
    %c2_29 = arith.constant 2 : index
    %c3_30 = arith.constant 3 : index
    %72 = memref.load %arg2[%c2_29, %c3_30] : memref<5x4xf32, #tpu.memory_space<smem>>
    %73 = vector.broadcast %72 : f32 to vector<1x256xf32>
    %74 = arith.mulf %73, %5 : vector<1x256xf32>
    %75 = arith.addf %71, %74 : vector<1x256xf32>
    %cst_31 = arith.constant 5.000000e-01 : f32
    %76 = vector.broadcast %cst_31 : f32 to vector<1x256xf32>
    %77 = arith.mulf %76, %75 : vector<1x256xf32>
    %cst_32 = arith.constant 0.707106769 : f32
    %78 = vector.broadcast %cst_32 : f32 to vector<1x256xf32>
    %79 = arith.mulf %75, %78 : vector<1x256xf32>
    %80 = math.erf %79 : vector<1x256xf32>
    %cst_33 = arith.constant 1.000000e+00 : f32
    %81 = vector.broadcast %cst_33 : f32 to vector<1x256xf32>
    %82 = arith.addf %81, %80 : vector<1x256xf32>
    %83 = arith.mulf %77, %82 : vector<1x256xf32>
    %c3_34 = arith.constant 3 : index
    %84 = memref.load %arg3[%c3_34] : memref<5xf32, #tpu.memory_space<smem>>
    %85 = vector.broadcast %84 : f32 to vector<1x256xf32>
    %c3_35 = arith.constant 3 : index
    %c0_36 = arith.constant 0 : index
    %86 = memref.load %arg2[%c3_35, %c0_36] : memref<5x4xf32, #tpu.memory_space<smem>>
    %87 = vector.broadcast %86 : f32 to vector<1x256xf32>
    %88 = arith.mulf %87, %2 : vector<1x256xf32>
    %89 = arith.addf %85, %88 : vector<1x256xf32>
    %c3_37 = arith.constant 3 : index
    %c1_38 = arith.constant 1 : index
    %90 = memref.load %arg2[%c3_37, %c1_38] : memref<5x4xf32, #tpu.memory_space<smem>>
    %91 = vector.broadcast %90 : f32 to vector<1x256xf32>
    %92 = arith.mulf %91, %3 : vector<1x256xf32>
    %93 = arith.addf %89, %92 : vector<1x256xf32>
    %c3_39 = arith.constant 3 : index
    %c2_40 = arith.constant 2 : index
    %94 = memref.load %arg2[%c3_39, %c2_40] : memref<5x4xf32, #tpu.memory_space<smem>>
    %95 = vector.broadcast %94 : f32 to vector<1x256xf32>
    %96 = arith.mulf %95, %4 : vector<1x256xf32>
    %97 = arith.addf %93, %96 : vector<1x256xf32>
    %c3_41 = arith.constant 3 : index
    %c3_42 = arith.constant 3 : index
    %98 = memref.load %arg2[%c3_41, %c3_42] : memref<5x4xf32, #tpu.memory_space<smem>>
    %99 = vector.broadcast %98 : f32 to vector<1x256xf32>
    %100 = arith.mulf %99, %5 : vector<1x256xf32>
    %101 = arith.addf %97, %100 : vector<1x256xf32>
    %cst_43 = arith.constant 5.000000e-01 : f32
    %102 = vector.broadcast %cst_43 : f32 to vector<1x256xf32>
    %103 = arith.mulf %102, %101 : vector<1x256xf32>
    %cst_44 = arith.constant 0.707106769 : f32
    %104 = vector.broadcast %cst_44 : f32 to vector<1x256xf32>
    %105 = arith.mulf %101, %104 : vector<1x256xf32>
    %106 = math.erf %105 : vector<1x256xf32>
    %cst_45 = arith.constant 1.000000e+00 : f32
    %107 = vector.broadcast %cst_45 : f32 to vector<1x256xf32>
    %108 = arith.addf %107, %106 : vector<1x256xf32>
    %109 = arith.mulf %103, %108 : vector<1x256xf32>
    %c4 = arith.constant 4 : index
    %110 = memref.load %arg3[%c4] : memref<5xf32, #tpu.memory_space<smem>>
    %111 = vector.broadcast %110 : f32 to vector<1x256xf32>
    %c4_46 = arith.constant 4 : index
    %c0_47 = arith.constant 0 : index
    %112 = memref.load %arg2[%c4_46, %c0_47] : memref<5x4xf32, #tpu.memory_space<smem>>
    %113 = vector.broadcast %112 : f32 to vector<1x256xf32>
    %114 = arith.mulf %113, %2 : vector<1x256xf32>
    %115 = arith.addf %111, %114 : vector<1x256xf32>
    %c4_48 = arith.constant 4 : index
    %c1_49 = arith.constant 1 : index
    %116 = memref.load %arg2[%c4_48, %c1_49] : memref<5x4xf32, #tpu.memory_space<smem>>
    %117 = vector.broadcast %116 : f32 to vector<1x256xf32>
    %118 = arith.mulf %117, %3 : vector<1x256xf32>
    %119 = arith.addf %115, %118 : vector<1x256xf32>
    %c4_50 = arith.constant 4 : index
    %c2_51 = arith.constant 2 : index
    %120 = memref.load %arg2[%c4_50, %c2_51] : memref<5x4xf32, #tpu.memory_space<smem>>
    %121 = vector.broadcast %120 : f32 to vector<1x256xf32>
    %122 = arith.mulf %121, %4 : vector<1x256xf32>
    %123 = arith.addf %119, %122 : vector<1x256xf32>
    %c4_52 = arith.constant 4 : index
    %c3_53 = arith.constant 3 : index
    %124 = memref.load %arg2[%c4_52, %c3_53] : memref<5x4xf32, #tpu.memory_space<smem>>
    %125 = vector.broadcast %124 : f32 to vector<1x256xf32>
    %126 = arith.mulf %125, %5 : vector<1x256xf32>
    %127 = arith.addf %123, %126 : vector<1x256xf32>
    %cst_54 = arith.constant 5.000000e-01 : f32
    %128 = vector.broadcast %cst_54 : f32 to vector<1x256xf32>
    %129 = arith.mulf %128, %127 : vector<1x256xf32>
    %cst_55 = arith.constant 0.707106769 : f32
    %130 = vector.broadcast %cst_55 : f32 to vector<1x256xf32>
    %131 = arith.mulf %127, %130 : vector<1x256xf32>
    %132 = math.erf %131 : vector<1x256xf32>
    %cst_56 = arith.constant 1.000000e+00 : f32
    %133 = vector.broadcast %cst_56 : f32 to vector<1x256xf32>
    %134 = arith.addf %133, %132 : vector<1x256xf32>
    %135 = arith.mulf %129, %134 : vector<1x256xf32>
    %c0_57 = arith.constant 0 : index
    %136 = memref.load %arg5[%c0_57] : memref<4xf32, #tpu.memory_space<smem>>
    %137 = vector.broadcast %136 : f32 to vector<1x256xf32>
    %c0_58 = arith.constant 0 : index
    %c0_59 = arith.constant 0 : index
    %138 = memref.load %arg4[%c0_58, %c0_59] : memref<4x5xf32, #tpu.memory_space<smem>>
    %139 = vector.broadcast %138 : f32 to vector<1x256xf32>
    %140 = arith.mulf %139, %31 : vector<1x256xf32>
    %141 = arith.addf %137, %140 : vector<1x256xf32>
    %c0_60 = arith.constant 0 : index
    %c1_61 = arith.constant 1 : index
    %142 = memref.load %arg4[%c0_60, %c1_61] : memref<4x5xf32, #tpu.memory_space<smem>>
    %143 = vector.broadcast %142 : f32 to vector<1x256xf32>
    %144 = arith.mulf %143, %57 : vector<1x256xf32>
    %145 = arith.addf %141, %144 : vector<1x256xf32>
    %c0_62 = arith.constant 0 : index
    %c2_63 = arith.constant 2 : index
    %146 = memref.load %arg4[%c0_62, %c2_63] : memref<4x5xf32, #tpu.memory_space<smem>>
    %147 = vector.broadcast %146 : f32 to vector<1x256xf32>
    %148 = arith.mulf %147, %83 : vector<1x256xf32>
    %149 = arith.addf %145, %148 : vector<1x256xf32>
    %c0_64 = arith.constant 0 : index
    %c3_65 = arith.constant 3 : index
    %150 = memref.load %arg4[%c0_64, %c3_65] : memref<4x5xf32, #tpu.memory_space<smem>>
    %151 = vector.broadcast %150 : f32 to vector<1x256xf32>
    %152 = arith.mulf %151, %109 : vector<1x256xf32>
    %153 = arith.addf %149, %152 : vector<1x256xf32>
    %c0_66 = arith.constant 0 : index
    %c4_67 = arith.constant 4 : index
    %154 = memref.load %arg4[%c0_66, %c4_67] : memref<4x5xf32, #tpu.memory_space<smem>>
    %155 = vector.broadcast %154 : f32 to vector<1x256xf32>
    %156 = arith.mulf %155, %135 : vector<1x256xf32>
    %157 = arith.addf %153, %156 : vector<1x256xf32>
    %158 = arith.addf %157, %2 : vector<1x256xf32>
    %c0_68 = arith.constant 0 : index
    %c0_69 = arith.constant 0 : index
    %c0_70 = arith.constant 0 : index
    %159 = vector.load %arg7[%c0_68, %c0_69, %c0_70] : memref<1x4x256xf32, #tpu.memory_space<vmem>>, vector<1x1x256xf32>
    %160 = vector.shape_cast %159 : vector<1x1x256xf32> to vector<1x256xf32>
    %161 = vector.shape_cast %158 : vector<1x256xf32> to vector<1x1x256xf32>
    tpu.vector_store %arg7[%c0_68, %c0_69, %c0_70], %161 {strides = array<i32>} : memref<1x4x256xf32, #tpu.memory_space<vmem>>, vector<1x1x256xf32>,
    %c1_71 = arith.constant 1 : index
    %162 = memref.load %arg5[%c1_71] : memref<4xf32, #tpu.memory_space<smem>>
    %163 = vector.broadcast %162 : f32 to vector<1x256xf32>
    %c1_72 = arith.constant 1 : index
    %c0_73 = arith.constant 0 : index
    %164 = memref.load %arg4[%c1_72, %c0_73] : memref<4x5xf32, #tpu.memory_space<smem>>
    %165 = vector.broadcast %164 : f32 to vector<1x256xf32>
    %166 = arith.mulf %165, %31 : vector<1x256xf32>
    %167 = arith.addf %163, %166 : vector<1x256xf32>
    %c1_74 = arith.constant 1 : index
    %c1_75 = arith.constant 1 : index
    %168 = memref.load %arg4[%c1_74, %c1_75] : memref<4x5xf32, #tpu.memory_space<smem>>
    %169 = vector.broadcast %168 : f32 to vector<1x256xf32>
    %170 = arith.mulf %169, %57 : vector<1x256xf32>
    %171 = arith.addf %167, %170 : vector<1x256xf32>
    %c1_76 = arith.constant 1 : index
    %c2_77 = arith.constant 2 : index
    %172 = memref.load %arg4[%c1_76, %c2_77] : memref<4x5xf32, #tpu.memory_space<smem>>
    %173 = vector.broadcast %172 : f32 to vector<1x256xf32>
    %174 = arith.mulf %173, %83 : vector<1x256xf32>
    %175 = arith.addf %171, %174 : vector<1x256xf32>
    %c1_78 = arith.constant 1 : index
    %c3_79 = arith.constant 3 : index
    %176 = memref.load %arg4[%c1_78, %c3_79] : memref<4x5xf32, #tpu.memory_space<smem>>
    %177 = vector.broadcast %176 : f32 to vector<1x256xf32>
    %178 = arith.mulf %177, %109 : vector<1x256xf32>
    %179 = arith.addf %175, %178 : vector<1x256xf32>
    %c1_80 = arith.constant 1 : index
    %c4_81 = arith.constant 4 : index
    %180 = memref.load %arg4[%c1_80, %c4_81] : memref<4x5xf32, #tpu.memory_space<smem>>
    %181 = vector.broadcast %180 : f32 to vector<1x256xf32>
    %182 = arith.mulf %181, %135 : vector<1x256xf32>
    %183 = arith.addf %179, %182 : vector<1x256xf32>
    %184 = arith.addf %183, %3 : vector<1x256xf32>
    %c0_82 = arith.constant 0 : index
    %c1_83 = arith.constant 1 : index
    %c0_84 = arith.constant 0 : index
    %185 = vector.load %arg7[%c0_82, %c1_83, %c0_84] : memref<1x4x256xf32, #tpu.memory_space<vmem>>, vector<1x1x256xf32>
    %186 = vector.shape_cast %185 : vector<1x1x256xf32> to vector<1x256xf32>
    %187 = vector.shape_cast %184 : vector<1x256xf32> to vector<1x1x256xf32>
    tpu.vector_store %arg7[%c0_82, %c1_83, %c0_84], %187 {strides = array<i32>} : memref<1x4x256xf32, #tpu.memory_space<vmem>>, vector<1x1x256xf32>,
    %c2_85 = arith.constant 2 : index
    %188 = memref.load %arg5[%c2_85] : memref<4xf32, #tpu.memory_space<smem>>
    %189 = vector.broadcast %188 : f32 to vector<1x256xf32>
    %c2_86 = arith.constant 2 : index
    %c0_87 = arith.constant 0 : index
    %190 = memref.load %arg4[%c2_86, %c0_87] : memref<4x5xf32, #tpu.memory_space<smem>>
    %191 = vector.broadcast %190 : f32 to vector<1x256xf32>
    %192 = arith.mulf %191, %31 : vector<1x256xf32>
    %193 = arith.addf %189, %192 : vector<1x256xf32>
    %c2_88 = arith.constant 2 : index
    %c1_89 = arith.constant 1 : index
    %194 = memref.load %arg4[%c2_88, %c1_89] : memref<4x5xf32, #tpu.memory_space<smem>>
    %195 = vector.broadcast %194 : f32 to vector<1x256xf32>
    %196 = arith.mulf %195, %57 : vector<1x256xf32>
    %197 = arith.addf %193, %196 : vector<1x256xf32>
    %c2_90 = arith.constant 2 : index
    %c2_91 = arith.constant 2 : index
    %198 = memref.load %arg4[%c2_90, %c2_91] : memref<4x5xf32, #tpu.memory_space<smem>>
    %199 = vector.broadcast %198 : f32 to vector<1x256xf32>
    %200 = arith.mulf %199, %83 : vector<1x256xf32>
    %201 = arith.addf %197, %200 : vector<1x256xf32>
    %c2_92 = arith.constant 2 : index
    %c3_93 = arith.constant 3 : index
    %202 = memref.load %arg4[%c2_92, %c3_93] : memref<4x5xf32, #tpu.memory_space<smem>>
    %203 = vector.broadcast %202 : f32 to vector<1x256xf32>
    %204 = arith.mulf %203, %109 : vector<1x256xf32>
    %205 = arith.addf %201, %204 : vector<1x256xf32>
    %c2_94 = arith.constant 2 : index
    %c4_95 = arith.constant 4 : index
    %206 = memref.load %arg4[%c2_94, %c4_95] : memref<4x5xf32, #tpu.memory_space<smem>>
    %207 = vector.broadcast %206 : f32 to vector<1x256xf32>
    %208 = arith.mulf %207, %135 : vector<1x256xf32>
    %209 = arith.addf %205, %208 : vector<1x256xf32>
    %210 = arith.addf %209, %4 : vector<1x256xf32>
    %c0_96 = arith.constant 0 : index
    %c2_97 = arith.constant 2 : index
    %c0_98 = arith.constant 0 : index
    %211 = vector.load %arg7[%c0_96, %c2_97, %c0_98] : memref<1x4x256xf32, #tpu.memory_space<vmem>>, vector<1x1x256xf32>
    %212 = vector.shape_cast %211 : vector<1x1x256xf32> to vector<1x256xf32>
    %213 = vector.shape_cast %210 : vector<1x256xf32> to vector<1x1x256xf32>
    tpu.vector_store %arg7[%c0_96, %c2_97, %c0_98], %213 {strides = array<i32>} : memref<1x4x256xf32, #tpu.memory_space<vmem>>, vector<1x1x256xf32>,
    %c3_99 = arith.constant 3 : index
    %214 = memref.load %arg5[%c3_99] : memref<4xf32, #tpu.memory_space<smem>>
    %215 = vector.broadcast %214 : f32 to vector<1x256xf32>
    %c3_100 = arith.constant 3 : index
    %c0_101 = arith.constant 0 : index
    %216 = memref.load %arg4[%c3_100, %c0_101] : memref<4x5xf32, #tpu.memory_space<smem>>
    %217 = vector.broadcast %216 : f32 to vector<1x256xf32>
    %218 = arith.mulf %217, %31 : vector<1x256xf32>
    %219 = arith.addf %215, %218 : vector<1x256xf32>
    %c3_102 = arith.constant 3 : index
    %c1_103 = arith.constant 1 : index
    %220 = memref.load %arg4[%c3_102, %c1_103] : memref<4x5xf32, #tpu.memory_space<smem>>
    %221 = vector.broadcast %220 : f32 to vector<1x256xf32>
    %222 = arith.mulf %221, %57 : vector<1x256xf32>
    %223 = arith.addf %219, %222 : vector<1x256xf32>
    %c3_104 = arith.constant 3 : index
    %c2_105 = arith.constant 2 : index
    %224 = memref.load %arg4[%c3_104, %c2_105] : memref<4x5xf32, #tpu.memory_space<smem>>
    %225 = vector.broadcast %224 : f32 to vector<1x256xf32>
    %226 = arith.mulf %225, %83 : vector<1x256xf32>
    %227 = arith.addf %223, %226 : vector<1x256xf32>
    %c3_106 = arith.constant 3 : index
    %c3_107 = arith.constant 3 : index
    %228 = memref.load %arg4[%c3_106, %c3_107] : memref<4x5xf32, #tpu.memory_space<smem>>
    %229 = vector.broadcast %228 : f32 to vector<1x256xf32>
    %230 = arith.mulf %229, %109 : vector<1x256xf32>
    %231 = arith.addf %227, %230 : vector<1x256xf32>
    %c3_108 = arith.constant 3 : index
    %c4_109 = arith.constant 4 : index
    %232 = memref.load %arg4[%c3_108, %c4_109] : memref<4x5xf32, #tpu.memory_space<smem>>
    %233 = vector.broadcast %232 : f32 to vector<1x256xf32>
    %234 = arith.mulf %233, %135 : vector<1x256xf32>
    %235 = arith.addf %231, %234 : vector<1x256xf32>
    %236 = arith.addf %235, %5 : vector<1x256xf32>
    %c0_110 = arith.constant 0 : index
    %c3_111 = arith.constant 3 : index
    %c0_112 = arith.constant 0 : index
    %237 = vector.load %arg7[%c0_110, %c3_111, %c0_112] : memref<1x4x256xf32, #tpu.memory_space<vmem>>, vector<1x1x256xf32>
    %238 = vector.shape_cast %237 : vector<1x1x256xf32> to vector<1x256xf32>
    %239 = vector.shape_cast %236 : vector<1x256xf32> to vector<1x1x256xf32>
    tpu.vector_store %arg7[%c0_110, %c3_111, %c0_112], %239 {strides = array<i32>} : memref<1x4x256xf32, #tpu.memory_space<vmem>>, vector<1x1x256xf32>,
    return
  }
  func.func @transform_0(%arg0: i32, %arg1: i32, %arg2: memref<5x4xf32, #tpu.memory_space<smem>>, %arg3: memref<5xf32, #tpu.memory_space<smem>>, %arg4: memref<4x5xf32, #tpu.memory_space<smem>>, %arg5: memref<4xf32, #tpu.memory_space<smem>>) -> (i32, i32, i32) {
    %c0_i32 = arith.constant 0 : i32
    %c0_i32_0 = arith.constant 0 : i32
    return %arg0, %c0_i32, %arg1 : i32, i32, i32
  }
  func.func @transform_1(%arg0: i32, %arg1: i32, %arg2: memref<5x4xf32, #tpu.memory_space<smem>>, %arg3: memref<5xf32, #tpu.memory_space<smem>>, %arg4: memref<4x5xf32, #tpu.memory_space<smem>>, %arg5: memref<4xf32, #tpu.memory_space<smem>>) -> (i32, i32, i32) {
    %c0_i32 = arith.constant 0 : i32
    %c0_i32_0 = arith.constant 0 : i32
    return %arg0, %c0_i32, %arg1 : i32, i32, i32
  }
}

</mosaic_0001>

<llo_original>
// kernel: tpu_custom_call.1
$region0: #{tpu_custom_call.1}
  #allocation0 [shape = 'u32[]', space=smem, size = 0x4, offset = 0x4, fixed_abs, tag = 'smem constant byte address 0x4 - core index']
  #allocation1 [shape = 'u32[72,128]{1,0:T(1,128)}', space=vmem, size = 0x9000, scoped, tag = 'internal scratch']
  #allocation2 [shape = 's32[1]{0}', space=sflag, size = 0x4, scoped, tag = 'scoped memory for tpu_custom_call.1']
  #allocation3 [shape = 'u8[4096]{0}', space=smem, size = 0x1000, scoped, tag = 'prefetched SMEM operand 0']
  #allocation4 [shape = 'u8[512]{0}', space=smem, size = 0x200, scoped, tag = 'prefetched SMEM operand 1']
  #allocation5 [shape = 'u8[2048]{0}', space=smem, size = 0x800, scoped, tag = 'prefetched SMEM operand 2']
  #allocation6 [shape = 'u8[512]{0}', space=smem, size = 0x200, scoped, tag = 'prefetched SMEM operand 3']
  %s0 = inlined_call_operand.vmem [shape: f32[5,4], index: 0, kind: input, shape index: {}]
  %s1 = inlined_call_operand.vmem [shape: f32[5], index: 1, kind: input, shape index: {}]
  %s2 = inlined_call_operand.vmem [shape: f32[4,5], index: 2, kind: input, shape index: {}]
  %s3 = inlined_call_operand.vmem [shape: f32[4], index: 3, kind: input, shape index: {}]
  %s4 = inlined_call_operand.hbm [shape: f32[2,4,256], index: 4, kind: input, shape index: {}]
  %s5 = inlined_call_operand.hbm [shape: f32[2,4,256], index: 5, kind: output, shape index: {}]
  %s6 = sld [smem:[#allocation0]]
  $region41: #{tpu_custom_call.1} parent=0
    _
  %s8 = ssub.s32 1, %s6
  %s9 = scalar_select 0, %s8, %s6
  %s11 = sshll.u32 %s0, 4
  %s12 = int_to_ptr.vmem [resolvable:$true] %s11
  %14 = dma.vmem_to_smem %s12, 128, [#allocation3], [#allocation2]
  %s16 = sshll.u32 %s1, 4
  %s17 = int_to_ptr.vmem [resolvable:$true] %s16
  %19 = dma.vmem_to_smem %s17, 16, [#allocation4], [#allocation2]
  %s21 = sshll.u32 %s2, 4
  %s22 = int_to_ptr.vmem [resolvable:$true] %s21
  %24 = dma.vmem_to_smem %s22, 64, [#allocation5], [#allocation2]
  %s26 = sshll.u32 %s3, 4
  %s27 = int_to_ptr.vmem [resolvable:$true] %s26
  %29 = dma.vmem_to_smem %s27, 16, [#allocation6], [#allocation2]
  %31 = dma.done [#allocation2], 224
  %32 = sfence
  $region1: #{tpu_custom_call.1} parent=0
    #allocation7 [shape = 'u8[8192]{0}', space=vmem, size = 0x2000, scoped, tag = 'input window, operand 4']
    #allocation8 [shape = 's32[2]{0}', space=sflag, size = 0x8, scoped, tag = 'scoped memory for tpu_custom_call.1']
    #allocation9 [shape = 's32[2]{0}', space=sflag, size = 0x8, scoped, tag = 'scoped memory for tpu_custom_call.1']
    #allocation10 [shape = 'u8[8192]{0}', space=vmem, size = 0x2000, scoped, tag = 'output window, operand 0']
    %33 = vsyncpa [#allocation8], 0
    %s34 = scalar_lea.sflag [#allocation8], 1
    %35 = vsyncpa %s34, 0
    %36 = vsyncpa [#allocation9], 0
    %s37 = scalar_lea.sflag [#allocation9], 1
    %38 = vsyncpa %s37, 0
    loop: start=0, step=1, limit=4
    $region2: #{tpu_custom_call.1} parent=1 // loop_pre_header
      _
    $region3: #{tpu_custom_call.1} parent=1 // loop_header
      %s40 = sphi 0, %s44
      %p41 = scmp.ge.s32.totalorder %s40, 4
      %s47 = sphi 0, %s59
      %s48 = sphi 0, %s55
      %s49 = sphi 0, %s47
      %s50 = sphi 0, %s48
      %s51 = sphi 0, %s49
      %s52 = sphi 0, %s50
      %s64 = sphi 0, %s66
      %s67 = sphi 0, %s64
      %s68 = sphi 0, %s67
      %s84 = sphi 0, %s68
      %s92 = sphi 0, %s94
      %s95 = sphi 0, %s92
      %s96 = sphi 0, %s95
      %s112 = sphi 0, %s96
    $region4: #{tpu_custom_call.1} parent=1 // loop_header_branch
      %43 = sbr.rel (%p41) target = $region8
    $region5: #{tpu_custom_call.1} parent=1 // loop_body
      %s45 = ssub.s32 %s40, 1
      %s46 = ssub.s32 %s40, 2
      %s53 = sadd.s32 1, %s48
      %p54 = scmp.ge.s32.totalorder %s53, 1
      %s55 = scalar_select %p54, 0, %s53
      %s56 = sadd.s32 1, %s47
      %s57 = scalar_select %p54, %s56, %s47
      %p58 = scmp.ge.s32.totalorder %s57, 2
      %s59 = scalar_select %p58, 0, %s57
      %s60 = ssub.s32 %s47, %s59
      %s61 = ssub.s32 %s48, %s55
      %s62 = sor.u32 %s60, %s61
      %p63 = scmp.eq.s32.totalorder %s62, 0
      %s65 = sadd.s32 %s64, 1
      %s66 = scalar_select %p63, %s64, %s65
      %p69 = pneg %p63
      %p70 = scmp.eq.s32.totalorder %s40, 1
      %p71 = por %p69, %p70
      %p72 = scmp.ne.s32.totalorder %s64, %s67
      %p73 = scmp.eq.s32.totalorder %s40, 0
      %p74 = por %p72, %p73
      %p75 = scmp.ne.s32.totalorder %s64, %s67
      %p76 = scmp.eq.s32.totalorder %s45, 1
      %p77 = por %p75, %p76
      %p78 = scmp.ne.s32.totalorder %s67, %s68
      %p79 = scmp.eq.s32.totalorder %s45, 0
      %p80 = por %p78, %p79
      %p81 = scmp.ne.s32.totalorder %s67, %s68
      %p82 = scmp.eq.s32.totalorder %s46, 1
      %p83 = por %p81, %p82
      %p85 = scmp.ne.s32.totalorder %s68, %s84
      %p86 = scmp.eq.s32.totalorder %s46, 0
      %p87 = por %p85, %p86
      %s88 = ssub.s32 %s47, %s59
      %s89 = ssub.s32 %s48, %s55
      %s90 = sor.u32 %s88, %s89
      %p91 = scmp.eq.s32.totalorder %s90, 0
      %s93 = sadd.s32 %s92, 1
      %s94 = scalar_select %p91, %s92, %s93
      %p97 = pneg %p91
      %p98 = scmp.eq.s32.totalorder %s40, 1
      %p99 = por %p97, %p98
      %p100 = scmp.ne.s32.totalorder %s92, %s95
      %p101 = scmp.eq.s32.totalorder %s40, 0
      %p102 = por %p100, %p101
      %p103 = scmp.ne.s32.totalorder %s92, %s95
      %p104 = scmp.eq.s32.totalorder %s45, 1
      %p105 = por %p103, %p104
      %p106 = scmp.ne.s32.totalorder %s95, %s96
      %p107 = scmp.eq.s32.totalorder %s45, 0
      %p108 = por %p106, %p107
      %p109 = scmp.ne.s32.totalorder %s95, %s96
      %p110 = scmp.eq.s32.totalorder %s46, 1
      %p111 = por %p109, %p110
      %p113 = scmp.ne.s32.totalorder %s96, %s112
      %p114 = scmp.eq.s32.totalorder %s46, 0
      %p115 = por %p113, %p114
      %p116 = scmp.le.s32.totalorder 1, %s40
      %p117 = scmp.lt.s32.totalorder %s40, 3
      %p118 = pnand %p116, %p117
      %p119 = pneg %p118
      // Predicated region
      $region9: #{tpu_custom_call.1} parent=5 // pred_check
        _
      $region10: #{tpu_custom_call.1} parent=5 // pred_check_branch
        %121 = sbr.rel (%p118) target = $region12
      $region11: #{tpu_custom_call.1} parent=5 // pred_region
        %s122 = ssub.s32 %s40, 1
      $region12: #{tpu_custom_call.1} parent=5 // pred_fallthru
        _
      %p123 = scmp.lt.s32.totalorder %s40, 2
      // Predicated region
      $region13: #{tpu_custom_call.1} parent=5 // pred_check
        %p124 = pneg %p123
      $region14: #{tpu_custom_call.1} parent=5 // pred_check_branch
        %126 = sbr.rel (%p124) target = $region16
      $region15: #{tpu_custom_call.1} parent=5 // pred_region
        // Predicated region
        $region17: #{tpu_custom_call.1} parent=15 // pred_check
          %p127 = pneg %p74
        $region18: #{tpu_custom_call.1} parent=15 // pred_check_branch
          %129 = sbr.rel (%p127) target = $region20
        $region19: #{tpu_custom_call.1} parent=15 // pred_region
          %s130 = sand.u32 %s64, 1
          %s131 = scalar_lea.sflag [#allocation8], %s130
          %s132 = sand.u32 %s64, 1
          %s133 = smul.addr %s132, 8
          %s134 = scalar_lea.vmem [#allocation7], %s133
          %s135 = smul.u32 2, %s48
          %137 = vsyncadd %s131, 0
          %s138 = smul.addr %s47, 2
          %s139 = sadd.s32 %s135, %s138
          %s140 = smul.addr %s139, 4
          %s141 = scalar_lea.hbm %s4, %s140
          %s143 = sshll.u32 %s141, 4
          %s144 = int_to_ptr.hbm [resolvable:$true] %s143
          %s145 = sshll.u32 %s134, 4
          %s146 = int_to_ptr.vmem [resolvable:$true] %s145
          %148 = dma.hbm_to_vmem [thread:$0]  %s144, 128, %s146, %s131
        $region20: #{tpu_custom_call.1} parent=15 // pred_fallthru
          _
      $region16: #{tpu_custom_call.1} parent=5 // pred_fallthru
        _
      %p149 = scmp.le.s32.totalorder 1, %s40
      %p150 = scmp.lt.s32.totalorder %s40, 3
      %p151 = pnand %p149, %p150
      %p152 = pneg %p151
      // Predicated region
      $region21: #{tpu_custom_call.1} parent=5 // pred_check
        _
      $region22: #{tpu_custom_call.1} parent=5 // pred_check_branch
        %154 = sbr.rel (%p151) target = $region24
      $region23: #{tpu_custom_call.1} parent=5 // pred_region
        %s155 = ssub.s32 %s40, 1
        %s156 = sand.u32 %s67, 1
        %s157 = scalar_lea.sflag [#allocation8], %s156
        %s158 = sand.u32 %s67, 1
        %s159 = smul.addr %s158, 8
        %s160 = scalar_lea.vmem [#allocation7], %s159
        // Predicated region
        $region25: #{tpu_custom_call.1} parent=23 // pred_check
          %p161 = pneg %p80
        $region26: #{tpu_custom_call.1} parent=23 // pred_check_branch
          %163 = sbr.rel (%p161) target = $region28
        $region27: #{tpu_custom_call.1} parent=23 // pred_region
          %165 = dma.done %s157, 128
        $region28: #{tpu_custom_call.1} parent=23 // pred_fallthru
          _
        %s166 = sand.u32 %s67, 1
        %s167 = scalar_lea.sflag [#allocation8], %s166
        %s168 = sand.u32 %s67, 1
        %s169 = smul.addr %s168, 8
        %s170 = scalar_lea.vmem [#allocation7], %s169
        %p171 = pneg %p80
        %p172 = pneg %p77
        %p173 = pneg %p108
        %p174 = pneg %p105
        %s175 = sand.u32 %s95, 1
        %s176 = scalar_lea.sflag [#allocation9], %s175
        %s177 = sand.u32 %s95, 1
        %s178 = smul.addr %s177, 8
        %s179 = scalar_lea.vmem [#allocation10], %s178
        %s180 = smul.u32 2, %s50
        %s181 = smul.u32 2, %s50
        %v182 = vld [vmem:[%s160] sm:$0xff]
        %s183 = sld [smem:[#allocation4]]
        %v184 = vstv %s183
        %s185 = sld [smem:[#allocation3]]
        %v186 = vstv %s185
        %v187 = vmul.f32 %v186, %v182
        %v188 = vadd.f32 %v184, %v187
        %s189 = sld [smem:[#allocation3 + $0x1]]
        %v190 = vstv %s189
        %v191 = vmul.f32 %v190, %v182
        %v193 = vrot.slane %v191, 5
        %v194 = vrot.slane %v193, 4
        %v196 = vadd.f32 %v188, %v194
        %s197 = sld [smem:[#allocation3 + $0x2]]
        %v198 = vstv %s197
        %v199 = vmul.f32 %v198, %v182
        %v201 = vrot.slane %v199, 6
        %v202 = vrot.slane %v201, 4
        %v204 = vadd.f32 %v196, %v202
        %s205 = sld [smem:[#allocation3 + $0x3]]
        %v206 = vstv %s205
        %v207 = vmul.f32 %v206, %v182
        %v209 = vrot.slane %v207, 7
        %v210 = vrot.slane %v209, 4
        %v212 = vadd.f32 %v204, %v210
        %v213 = vmul.f32 %v212, 0.5
        %v214 = vmul.f32 %v212, 0.70710677
        %v215 = vmul.f32 %v214, %v214
        %v216 = vmin.f32 16.0, %v215
        %v217 = vmul.f32 %v216, 2.1237322e-06
        %v218 = vadd.f32 %v217, 0.00028619796
        %v219 = vmul.f32 %v216, %v218
        %v220 = vadd.f32 %v219, 0.0036580483
        %v221 = vmul.f32 %v216, %v220
        %v222 = vadd.f32 %v221, 0.05243302
        %v223 = vmul.f32 %v216, %v222
        %v224 = vadd.f32 %v223, 0.18741608
        %v225 = vmul.f32 %v216, %v224
        %v226 = vadd.f32 %v225, 1.1283791
        %v227 = vmul.f32 %v214, %v226
        %v228 = vmul.f32 %v216, 3.8918573e-05
        %v229 = vadd.f32 %v228, 0.001143296
        %v230 = vmul.f32 %v216, %v229
        %v231 = vadd.f32 %v230, 0.014752088
        %v232 = vmul.f32 %v216, %v231
        %v233 = vadd.f32 %v232, 0.112945676
        %v234 = vmul.f32 %v216, %v233
        %v235 = vadd.f32 %v234, 0.4994258
        %v236 = vmul.f32 %v216, %v235
        %v237 = vadd.f32 %v236, 1.0
        %v238 = vrcp.pop %v237
        %v239 = vmul.f32 %v237, %v238
        %v240 = vsub.f32 1.0, %v239
        %v241 = vmul.f32 %v238, %v240
        %v242 = vadd.f32 %v238, %v241
        %vm243 = vweird.f32 %v237
        %vm244 = vweird.f32 %v238
        %vm245 = vmor %vm243, %vm244
        %v246 = vsel %vm245, %v238, %v242
        %v247 = vand.u32 2147483647, %v237
        %vm248 = vcmp.eq.f32.partialorder %v247, 8.507059e+37
        %v249 = vand.u32 %v237, 2147483648
        %v250 = vor.u32 1.1754944e-38, %v249
        %v251 = vsel %vm248, %v250, %v246
        %v252 = vmul.f32 %v227, %v251
        %v253 = vmin.f32 %v252, 1.0
        %v254 = vmax.f32 %v253, -1.0
        %v255 = vadd.f32 %v254, 1.0
        %v256 = vmul.f32 %v213, %v255
        %s257 = sld [smem:[#allocation4 + $0x1]]
        %v258 = vstv %s257
        %s259 = sld [smem:[#allocation3 + $0x80]]
        %v260 = vstv %s259
        %v261 = vmul.f32 %v260, %v182
        %v262 = vadd.f32 %v258, %v261
        %s263 = sld [smem:[#allocation3 + $0x81]]
        %v264 = vstv %s263
        %v265 = vmul.f32 %v264, %v182
        %v267 = vrot.slane %v265, 5
        %v268 = vrot.slane %v267, 4
        %v270 = vadd.f32 %v262, %v268
        %s271 = sld [smem:[#allocation3 + $0x82]]
        %v272 = vstv %s271
        %v273 = vmul.f32 %v272, %v182
        %v275 = vrot.slane %v273, 6
        %v276 = vrot.slane %v275, 4
        %v278 = vadd.f32 %v270, %v276
        %s279 = sld [smem:[#allocation3 + $0x83]]
        %v280 = vstv %s279
        %v281 = vmul.f32 %v280, %v182
        %v283 = vrot.slane %v281, 7
        %v284 = vrot.slane %v283, 4
        %v286 = vadd.f32 %v278, %v284
        %v287 = vmul.f32 %v286, 0.5
        %v288 = vmul.f32 %v286, 0.70710677
        %v289 = vmul.f32 %v288, %v288
        %v290 = vmin.f32 16.0, %v289
        %v291 = vmul.f32 %v290, 2.1237322e-06
        %v292 = vadd.f32 %v291, 0.00028619796
        %v293 = vmul.f32 %v290, %v292
        %v294 = vadd.f32 %v293, 0.0036580483
        %v295 = vmul.f32 %v290, %v294
        %v296 = vadd.f32 %v295, 0.05243302
        %v297 = vmul.f32 %v290, %v296
        %v298 = vadd.f32 %v297, 0.18741608
        %v299 = vmul.f32 %v290, %v298
        %v300 = vadd.f32 %v299, 1.1283791
        %v301 = vmul.f32 %v288, %v300
        %v302 = vmul.f32 %v290, 3.8918573e-05
        %v303 = vadd.f32 %v302, 0.001143296
        %v304 = vmul.f32 %v290, %v303
        %v305 = vadd.f32 %v304, 0.014752088
        %v306 = vmul.f32 %v290, %v305
        %v307 = vadd.f32 %v306, 0.112945676
        %v308 = vmul.f32 %v290, %v307
        %v309 = vadd.f32 %v308, 0.4994258
        %v310 = vmul.f32 %v290, %v309
        %v311 = vadd.f32 %v310, 1.0
        %v312 = vrcp.pop %v311
        %v313 = vmul.f32 %v311, %v312
        %v314 = vsub.f32 1.0, %v313
        %v315 = vmul.f32 %v312, %v314
        %v316 = vadd.f32 %v312, %v315
        %vm317 = vweird.f32 %v311
        %vm318 = vweird.f32 %v312
        %vm319 = vmor %vm317, %vm318
        %v320 = vsel %vm319, %v312, %v316
        %v321 = vand.u32 2147483647, %v311
        %vm322 = vcmp.eq.f32.partialorder %v321, 8.507059e+37
        %v323 = vand.u32 %v311, 2147483648
        %v324 = vor.u32 1.1754944e-38, %v323
        %v325 = vsel %vm322, %v324, %v320
        %v326 = vmul.f32 %v301, %v325
        %v327 = vmin.f32 %v326, 1.0
        %v328 = vmax.f32 %v327, -1.0
        %v329 = vadd.f32 %v328, 1.0
        %v330 = vmul.f32 %v287, %v329
        %s331 = sld [smem:[#allocation4 + $0x2]]
        %v332 = vstv %s331
        %s333 = sld [smem:[#allocation3 + $0x100]]
        %v334 = vstv %s333
        %v335 = vmul.f32 %v334, %v182
        %v336 = vadd.f32 %v332, %v335
        %s337 = sld [smem:[#allocation3 + $0x101]]
        %v338 = vstv %s337
        %v339 = vmul.f32 %v338, %v182
        %v341 = vrot.slane %v339, 5
        %v342 = vrot.slane %v341, 4
        %v344 = vadd.f32 %v336, %v342
        %s345 = sld [smem:[#allocation3 + $0x102]]
        %v346 = vstv %s345
        %v347 = vmul.f32 %v346, %v182
        %v349 = vrot.slane %v347, 6
        %v350 = vrot.slane %v349, 4
        %v352 = vadd.f32 %v344, %v350
        %s353 = sld [smem:[#allocation3 + $0x103]]
        %v354 = vstv %s353
        %v355 = vmul.f32 %v354, %v182
        %v357 = vrot.slane %v355, 7
        %v358 = vrot.slane %v357, 4
        %v360 = vadd.f32 %v352, %v358
        %v361 = vmul.f32 %v360, 0.5
        %v362 = vmul.f32 %v360, 0.70710677
        %v363 = vmul.f32 %v362, %v362
        %v364 = vmin.f32 16.0, %v363
        %v365 = vmul.f32 %v364, 2.1237322e-06
        %v366 = vadd.f32 %v365, 0.00028619796
        %v367 = vmul.f32 %v364, %v366
        %v368 = vadd.f32 %v367, 0.0036580483
        %v369 = vmul.f32 %v364, %v368
        %v370 = vadd.f32 %v369, 0.05243302
        %v371 = vmul.f32 %v364, %v370
        %v372 = vadd.f32 %v371, 0.18741608
        %v373 = vmul.f32 %v364, %v372
        %v374 = vadd.f32 %v373, 1.1283791
        %v375 = vmul.f32 %v362, %v374
        %v376 = vmul.f32 %v364, 3.8918573e-05
        %v377 = vadd.f32 %v376, 0.001143296
        %v378 = vmul.f32 %v364, %v377
        %v379 = vadd.f32 %v378, 0.014752088
        %v380 = vmul.f32 %v364, %v379
        %v381 = vadd.f32 %v380, 0.112945676
        %v382 = vmul.f32 %v364, %v381
        %v383 = vadd.f32 %v382, 0.4994258
        %v384 = vmul.f32 %v364, %v383
        %v385 = vadd.f32 %v384, 1.0
        %v386 = vrcp.pop %v385
        %v387 = vmul.f32 %v385, %v386
        %v388 = vsub.f32 1.0, %v387
        %v389 = vmul.f32 %v386, %v388
        %v390 = vadd.f32 %v386, %v389
        %vm391 = vweird.f32 %v385
        %vm392 = vweird.f32 %v386
        %vm393 = vmor %vm391, %vm392
        %v394 = vsel %vm393, %v386, %v390
        %v395 = vand.u32 2147483647, %v385
        %vm396 = vcmp.eq.f32.partialorder %v395, 8.507059e+37
        %v397 = vand.u32 %v385, 2147483648
        %v398 = vor.u32 1.1754944e-38, %v397
        %v399 = vsel %vm396, %v398, %v394
        %v400 = vmul.f32 %v375, %v399
        %v401 = vmin.f32 %v400, 1.0
        %v402 = vmax.f32 %v401, -1.0
        %v403 = vadd.f32 %v402, 1.0
        %v404 = vmul.f32 %v361, %v403
        %s405 = sld [smem:[#allocation4 + $0x3]]
        %v406 = vstv %s405
        %s407 = sld [smem:[#allocation3 + $0x180]]
        %v408 = vstv %s407
        %v409 = vmul.f32 %v408, %v182
        %v410 = vadd.f32 %v406, %v409
        %s411 = sld [smem:[#allocation3 + $0x181]]
        %v412 = vstv %s411
        %v413 = vmul.f32 %v412, %v182
        %v415 = vrot.slane %v413, 5
        %v416 = vrot.slane %v415, 4
        %v418 = vadd.f32 %v410, %v416
        %s419 = sld [smem:[#allocation3 + $0x182]]
        %v420 = vstv %s419
        %v421 = vmul.f32 %v420, %v182
        %v423 = vrot.slane %v421, 6
        %v424 = vrot.slane %v423, 4
        %v426 = vadd.f32 %v418, %v424
        %s427 = sld [smem:[#allocation3 + $0x183]]
        %v428 = vstv %s427
        %v429 = vmul.f32 %v428, %v182
        %v431 = vrot.slane %v429, 7
        %v432 = vrot.slane %v431, 4
        %v434 = vadd.f32 %v426, %v432
        %v435 = vmul.f32 %v434, 0.5
        %v436 = vmul.f32 %v434, 0.70710677
        %v437 = vmul.f32 %v436, %v436
        %v438 = vmin.f32 16.0, %v437
        %v439 = vmul.f32 %v438, 2.1237322e-06
        %v440 = vadd.f32 %v439, 0.00028619796
        %v441 = vmul.f32 %v438, %v440
        %v442 = vadd.f32 %v441, 0.0036580483
        %v443 = vmul.f32 %v438, %v442
        %v444 = vadd.f32 %v443, 0.05243302
        %v445 = vmul.f32 %v438, %v444
        %v446 = vadd.f32 %v445, 0.18741608
        %v447 = vmul.f32 %v438, %v446
        %v448 = vadd.f32 %v447, 1.1283791
        %v449 = vmul.f32 %v436, %v448
        %v450 = vmul.f32 %v438, 3.8918573e-05
        %v451 = vadd.f32 %v450, 0.001143296
        %v452 = vmul.f32 %v438, %v451
        %v453 = vadd.f32 %v452, 0.014752088
        %v454 = vmul.f32 %v438, %v453
        %v455 = vadd.f32 %v454, 0.112945676
        %v456 = vmul.f32 %v438, %v455
        %v457 = vadd.f32 %v456, 0.4994258
        %v458 = vmul.f32 %v438, %v457
        %v459 = vadd.f32 %v458, 1.0
        %v460 = vrcp.pop %v459
        %v461 = vmul.f32 %v459, %v460
        %v462 = vsub.f32 1.0, %v461
        %v463 = vmul.f32 %v460, %v462
        %v464 = vadd.f32 %v460, %v463
        %vm465 = vweird.f32 %v459
        %vm466 = vweird.f32 %v460
        %vm467 = vmor %vm465, %vm466
        %v468 = vsel %vm467, %v460, %v464
        %v469 = vand.u32 2147483647, %v459
        %vm470 = vcmp.eq.f32.partialorder %v469, 8.507059e+37
        %v471 = vand.u32 %v459, 2147483648
        %v472 = vor.u32 1.1754944e-38, %v471
        %v473 = vsel %vm470, %v472, %v468
        %v474 = vmul.f32 %v449, %v473
        %v475 = vmin.f32 %v474, 1.0
        %v476 = vmax.f32 %v475, -1.0
        %v477 = vadd.f32 %v476, 1.0
        %v478 = vmul.f32 %v435, %v477
        %s479 = sld [smem:[#allocation4 + $0x4]]
        %v480 = vstv %s479
        %s481 = sld [smem:[#allocation3 + $0x200]]
        %v482 = vstv %s481
        %v483 = vmul.f32 %v482, %v182
        %v484 = vadd.f32 %v480, %v483
        %s485 = sld [smem:[#allocation3 + $0x201]]
        %v486 = vstv %s485
        %v487 = vmul.f32 %v486, %v182
        %v489 = vrot.slane %v487, 5
        %v490 = vrot.slane %v489, 4
        %v492 = vadd.f32 %v484, %v490
        %s493 = sld [smem:[#allocation3 + $0x202]]
        %v494 = vstv %s493
        %v495 = vmul.f32 %v494, %v182
        %v497 = vrot.slane %v495, 6
        %v498 = vrot.slane %v497, 4
        %v500 = vadd.f32 %v492, %v498
        %s501 = sld [smem:[#allocation3 + $0x203]]
        %v502 = vstv %s501
        %v503 = vmul.f32 %v502, %v182
        %v505 = vrot.slane %v503, 7
        %v506 = vrot.slane %v505, 4
        %v508 = vadd.f32 %v500, %v506
        %v509 = vmul.f32 %v508, 0.5
        %v510 = vmul.f32 %v508, 0.70710677
        %v511 = vmul.f32 %v510, %v510
        %v512 = vmin.f32 16.0, %v511
        %v513 = vmul.f32 %v512, 2.1237322e-06
        %v514 = vadd.f32 %v513, 0.00028619796
        %v515 = vmul.f32 %v512, %v514
        %v516 = vadd.f32 %v515, 0.0036580483
        %v517 = vmul.f32 %v512, %v516
        %v518 = vadd.f32 %v517, 0.05243302
        %v519 = vmul.f32 %v512, %v518
        %v520 = vadd.f32 %v519, 0.18741608
        %v521 = vmul.f32 %v512, %v520
        %v522 = vadd.f32 %v521, 1.1283791
        %v523 = vmul.f32 %v510, %v522
        %v524 = vmul.f32 %v512, 3.8918573e-05
        %v525 = vadd.f32 %v524, 0.001143296
        %v526 = vmul.f32 %v512, %v525
        %v527 = vadd.f32 %v526, 0.014752088
        %v528 = vmul.f32 %v512, %v527
        %v529 = vadd.f32 %v528, 0.112945676
        %v530 = vmul.f32 %v512, %v529
        %v531 = vadd.f32 %v530, 0.4994258
        %v532 = vmul.f32 %v512, %v531
        %v533 = vadd.f32 %v532, 1.0
        %v534 = vrcp.pop %v533
        %v535 = vmul.f32 %v533, %v534
        %v536 = vsub.f32 1.0, %v535
        %v537 = vmul.f32 %v534, %v536
        %v538 = vadd.f32 %v534, %v537
        %vm539 = vweird.f32 %v533
        %vm540 = vweird.f32 %v534
        %vm541 = vmor %vm539, %vm540
        %v542 = vsel %vm541, %v534, %v538
        %v543 = vand.u32 2147483647, %v533
        %vm544 = vcmp.eq.f32.partialorder %v543, 8.507059e+37
        %v545 = vand.u32 %v533, 2147483648
        %v546 = vor.u32 1.1754944e-38, %v545
        %v547 = vsel %vm544, %v546, %v542
        %v548 = vmul.f32 %v523, %v547
        %v549 = vmin.f32 %v548, 1.0
        %v550 = vmax.f32 %v549, -1.0
        %v551 = vadd.f32 %v550, 1.0
        %v552 = vmul.f32 %v509, %v551
        %s553 = sld [smem:[#allocation6]]
        %v554 = vstv %s553
        %s555 = sld [smem:[#allocation5]]
        %v556 = vstv %s555
        %v557 = vmul.f32 %v556, %v256
        %v558 = vadd.f32 %v554, %v557
        %s559 = sld [smem:[#allocation5 + $0x1]]
        %v560 = vstv %s559
        %v561 = vmul.f32 %v560, %v330
        %v562 = vadd.f32 %v558, %v561
        %s563 = sld [smem:[#allocation5 + $0x2]]
        %v564 = vstv %s563
        %v565 = vmul.f32 %v564, %v404
        %v566 = vadd.f32 %v562, %v565
        %s567 = sld [smem:[#allocation5 + $0x3]]
        %v568 = vstv %s567
        %v569 = vmul.f32 %v568, %v478
        %v570 = vadd.f32 %v566, %v569
        %s571 = sld [smem:[#allocation5 + $0x4]]
        %v572 = vstv %s571
        %v573 = vmul.f32 %v572, %v552
        %v574 = vadd.f32 %v570, %v573
        %v575 = vadd.f32 %v574, %v182
        %v577 = vrot.slane %v575, 3
        %vm578 = vcmask 1040384
        %v579 = vsel %vm578, %v575, %v577
        %v581 = vlaneseq
        %vm582 = vcmp.ge.s32.totalorder %v581, 0
        %vm583 = vcmp.lt.s32.totalorder %v581, 256
        %vm584 = vmand %vm582, %vm583
        %585 = vst.msk [vmem:[%s179] ss:$4 sm:$0x3] %vm584, %v579
        %s586 = sld [smem:[#allocation6 + $0x1]]
        %v587 = vstv %s586
        %s588 = sld [smem:[#allocation5 + $0x80]]
        %v589 = vstv %s588
        %v590 = vmul.f32 %v589, %v256
        %v591 = vadd.f32 %v587, %v590
        %s592 = sld [smem:[#allocation5 + $0x81]]
        %v593 = vstv %s592
        %v594 = vmul.f32 %v593, %v330
        %v595 = vadd.f32 %v591, %v594
        %s596 = sld [smem:[#allocation5 + $0x82]]
        %v597 = vstv %s596
        %v598 = vmul.f32 %v597, %v404
        %v599 = vadd.f32 %v595, %v598
        %s600 = sld [smem:[#allocation5 + $0x83]]
        %v601 = vstv %s600
        %v602 = vmul.f32 %v601, %v478
        %v603 = vadd.f32 %v599, %v602
        %s604 = sld [smem:[#allocation5 + $0x84]]
        %v605 = vstv %s604
        %v606 = vmul.f32 %v605, %v552
        %v607 = vadd.f32 %v603, %v606
        %v609 = vrot.slane %v182, 5
        %v610 = vrot.slane %v609, 4
        %v612 = vadd.f32 %v607, %v610
        %v614 = vrot.slane %v612, 3
        %v615 = vsel %vm578, %v612, %v614
        %s617 = scalar_lea.vmem %s179, 1 [#allocation10]
        %618 = vst.msk [vmem:[%s617] ss:$4 sm:$0x3] %vm584, %v615
        %s619 = sld [smem:[#allocation6 + $0x2]]
        %v620 = vstv %s619
        %s621 = sld [smem:[#allocation5 + $0x100]]
        %v622 = vstv %s621
        %v623 = vmul.f32 %v622, %v256
        %v624 = vadd.f32 %v620, %v623
        %s625 = sld [smem:[#allocation5 + $0x101]]
        %v626 = vstv %s625
        %v627 = vmul.f32 %v626, %v330
        %v628 = vadd.f32 %v624, %v627
        %s629 = sld [smem:[#allocation5 + $0x102]]
        %v630 = vstv %s629
        %v631 = vmul.f32 %v630, %v404
        %v632 = vadd.f32 %v628, %v631
        %s633 = sld [smem:[#allocation5 + $0x103]]
        %v634 = vstv %s633
        %v635 = vmul.f32 %v634, %v478
        %v636 = vadd.f32 %v632, %v635
        %s637 = sld [smem:[#allocation5 + $0x104]]
        %v638 = vstv %s637
        %v639 = vmul.f32 %v638, %v552
        %v640 = vadd.f32 %v636, %v639
        %v641 = vrot.slane %v182, 6
        %v642 = vrot.slane %v641, 4
        %v644 = vadd.f32 %v640, %v642
        %v646 = vrot.slane %v644, 3
        %v647 = vsel %vm578, %v644, %v646
        %s649 = scalar_lea.vmem %s179, 2 [#allocation10]
        %650 = vst.msk [vmem:[%s649] ss:$4 sm:$0x3] %vm584, %v647
        %s651 = sld [smem:[#allocation6 + $0x3]]
        %v652 = vstv %s651
        %s653 = sld [smem:[#allocation5 + $0x180]]
        %v654 = vstv %s653
        %v655 = vmul.f32 %v654, %v256
        %v656 = vadd.f32 %v652, %v655
        %s657 = sld [smem:[#allocation5 + $0x181]]
        %v658 = vstv %s657
        %v659 = vmul.f32 %v658, %v330
        %v660 = vadd.f32 %v656, %v659
        %s661 = sld [smem:[#allocation5 + $0x182]]
        %v662 = vstv %s661
        %v663 = vmul.f32 %v662, %v404
        %v664 = vadd.f32 %v660, %v663
        %s665 = sld [smem:[#allocation5 + $0x183]]
        %v666 = vstv %s665
        %v667 = vmul.f32 %v666, %v478
        %v668 = vadd.f32 %v664, %v667
        %s669 = sld [smem:[#allocation5 + $0x184]]
        %v670 = vstv %s669
        %v671 = vmul.f32 %v670, %v552
        %v672 = vadd.f32 %v668, %v671
        %v673 = vrot.slane %v182, 7
        %v674 = vrot.slane %v673, 4
        %v676 = vadd.f32 %v672, %v674
        %v678 = vrot.slane %v676, 3
        %v679 = vsel %vm578, %v676, %v678
        %s681 = scalar_lea.vmem %s179, 3 [#allocation10]
        %682 = vst.msk [vmem:[%s681] ss:$4 sm:$0x3] %vm584, %v679
        %s683 = sand.u32 %s95, 1
        %s684 = scalar_lea.sflag [#allocation9], %s683
        %s685 = sand.u32 %s95, 1
        %s686 = smul.addr %s685, 8
        %s687 = scalar_lea.vmem [#allocation10], %s686
        // Predicated region
        $region29: #{tpu_custom_call.1} parent=23 // pred_check
          %p688 = pneg %p105
        $region30: #{tpu_custom_call.1} parent=23 // pred_check_branch
          %690 = sbr.rel (%p688) target = $region32
        $region31: #{tpu_custom_call.1} parent=23 // pred_region
          %s691 = smul.u32 2, %s50
          %693 = vsyncadd %s684, 0
          %s694 = smul.addr %s49, 2
          %s695 = sadd.s32 %s691, %s694
          %s696 = smul.addr %s695, 4
          %s697 = scalar_lea.hbm %s5, %s696
          %s699 = sshll.u32 %s687, 4
          %s700 = int_to_ptr.vmem [resolvable:$true] %s699
          %s701 = sshll.u32 %s697, 4
          %s702 = int_to_ptr.hbm [resolvable:$true] %s701
          %704 = dma.vmem_to_hbm [thread:$0]  %s700, 128, %s702, %s684
        $region32: #{tpu_custom_call.1} parent=23 // pred_fallthru
          _
      $region24: #{tpu_custom_call.1} parent=5 // pred_fallthru
        _
      %p705 = scmp.le.s32.totalorder 2, %s40
      // Predicated region
      $region33: #{tpu_custom_call.1} parent=5 // pred_check
        %p706 = pneg %p705
      $region34: #{tpu_custom_call.1} parent=5 // pred_check_branch
        %708 = sbr.rel (%p706) target = $region36
      $region35: #{tpu_custom_call.1} parent=5 // pred_region
        %s709 = ssub.s32 %s40, 2
        // Predicated region
        $region37: #{tpu_custom_call.1} parent=35 // pred_check
          %p710 = pneg %p111
        $region38: #{tpu_custom_call.1} parent=35 // pred_check_branch
          %712 = sbr.rel (%p710) target = $region40
        $region39: #{tpu_custom_call.1} parent=35 // pred_region
          %s713 = sand.u32 %s96, 1
          %s714 = scalar_lea.sflag [#allocation9], %s713
          %s715 = sand.u32 %s96, 1
          %s716 = smul.addr %s715, 8
          %s717 = scalar_lea.vmem [#allocation10], %s716
          %719 = dma.done %s714, 128
        $region40: #{tpu_custom_call.1} parent=35 // pred_fallthru
          _
      $region36: #{tpu_custom_call.1} parent=5 // pred_fallthru
        _
    $region6: #{tpu_custom_call.1} parent=1 // loop_footer
      %s44 = sadd.s32 1, %s40
    $region7: #{tpu_custom_call.1} parent=1 // loop_footer_branch
      %39 = sbr.rel target = $region3
    $region8: #{tpu_custom_call.1} parent=1 // loop_exit
      _
    %720 = vsyncpa [#allocation8], 1
    %s721 = scalar_lea.sflag [#allocation8], 1
    %722 = vsyncpa %s721, 1
    %723 = vsyncpa [#allocation9], 1
    %s724 = scalar_lea.sflag [#allocation9], 1
    %725 = vsyncpa %s724, 1

</llo_original>
